<compile_context>
chip_gen: v7x
topology: tpu7x:2x2x1
jax: 0.10.0
libtpu: 0.0.40
codegen_flags: <defaults>
</compile_context>

<pallas_src>
import jax
import jax.numpy as jnp
from jax.experimental import pallas as pl
from jax.experimental.pallas import tpu as pltpu

# ---------------- sizes (small, consistent with the module) ----------------
B = 2             # batch
L = 16            # sequence length
VOCAB = 50        # word vocab size
WORD_DIM = 22     # word embedding dim
POS_DIM = 5       # pos_dim
MAX_POS = 10      # opt['max_pos_length'] -> pos vocab = 2*MAX_POS + 1 = 21
POS_VOCAB = 2 * MAX_POS + 1
EMB_DIM = WORD_DIM + 2 * POS_DIM    # E = 32
HIDDEN = 32       # hidden_size (230 in the original; small here)
REL_NUM = 8       # rel_num
KW = 3            # conv kernel width (padding = 1)
BL = B * L        # 32 flattened (batch, position) rows
TAB_ROWS = 128    # combined embedding table rows (92 used, lane-padded to 128)
R_PAD = 128       # lane-dense padded logits width (sliced back to REL_NUM)
POS1_OFF = VOCAB                  # pos1 indices live in table rows [50, 71)
POS2_OFF = VOCAB + POS_VOCAB      # pos2 indices live in table rows [71, 92)


def _fused_model_kernel(xw_ref, xp1_ref, xp2_ref, tab_ref,
                        cw_ref, cb_ref, rw_ref, rb_ref, o_ref):
    """Whole forward (eval mode) for the full batch in ONE grid step.

    xw_ref/xp1_ref/xp2_ref : (BL, 1) int32 token / position indices (pre-flattened)
    tab_ref                : (128, E) block-diagonal combined embedding table
                             rows 0..49 word -> cols 0..21, rows 50..70 pos1 ->
                             cols 22..26, rows 71..91 pos2 -> cols 27..31
    cw_ref                 : (KW, E, H) conv weight, tap-major
    cb_ref                 : (1, H)     conv bias
    rw_ref                 : (H, 128)   rel weight, zero-padded to 128 lanes
    rb_ref                 : (1, 128)   rel bias, zero-padded
    o_ref                  : (B, 128)   lane-dense padded logits
    """
    f32 = jnp.float32

    # ---- 1. fused embedding lookup: ONE one-hot matmul on the block-diagonal
    # table (replaces three gathers + a 22/5/5-lane concat).
    col = jax.lax.broadcasted_iota(jnp.int32, (BL, TAB_ROWS), 1)
    hit = ((xw_ref[...] == col)
           | ((xp1_ref[...] + POS1_OFF) == col)
           | ((xp2_ref[...] + POS2_OFF) == col))
    onehot = hit.astype(f32)                                          # (BL, 128)
    emb = jnp.dot(onehot, tab_ref[...], preferred_element_type=f32)   # (BL, E)
    # TODO(synk): out-of-range / padding_idx=-1 tokens produce an all-zero
    # embedding here instead of nn.Embedding's padding-row semantics.

    # ---- 2. Conv1d(E->H, kernel=3, padding=1): neighbour rows produced by two
    # tiny 0/1 shift-matrix matmuls (batch-boundary zero padding baked into the
    # matrices), then three accumulated (BL,E)@(E,H) tap matmuls. No slices,
    # no concats, no XLU relayout — the extra MXU pushes are free slack here.
    ri = jax.lax.broadcasted_iota(jnp.int32, (BL, BL), 0)
    ci = jax.lax.broadcasted_iota(jnp.int32, (BL, BL), 1)
    shift_dn = ((ci + 1 == ri) & (ri % L != 0)).astype(f32)           # row l <- row l-1
    shift_up = ((ci == ri + 1) & (ri % L != (L - 1))).astype(f32)     # row l <- row l+1
    left = jnp.dot(shift_dn, emb, preferred_element_type=f32)         # x[l-1], 0 at seq start
    right = jnp.dot(shift_up, emb, preferred_element_type=f32)        # x[l+1], 0 at seq end
    conv = (jnp.dot(left, cw_ref[0], preferred_element_type=f32)
            + jnp.dot(emb, cw_ref[1], preferred_element_type=f32)
            + jnp.dot(right, cw_ref[2], preferred_element_type=f32))  # (BL, H)

    # ---- 3. max-pool over the sequence via a layout-clean reshape (L=16 is a
    # multiple of the 8-sublane tile), then conv bias AFTER the pool (exact:
    # a per-channel constant commutes with max over all L positions; would NOT
    # hold for masked / piecewise PCNN pooling), then ReLU.
    pooled = jnp.max(conv.reshape(B, L, HIDDEN), axis=1)              # (B, H)
    feat = jnp.maximum(pooled + cb_ref[...], 0.0)                     # (B, H)
    # Dropout is identity in eval mode.

    # ---- 4. rel linear, lane-dense (128-wide) store.
    o_ref[...] = jnp.dot(feat, rw_ref[...], preferred_element_type=f32) + rb_ref[...]


def prepare_params(params):
    """One-time conversion of module parameters into kernel-ready tensors.

    Hoisted out of the per-call path (the kernel is launch/latency-bound, so
    per-call pads/reshapes around the pallas_call would cost as much as the
    kernel itself).
    """
    tab = jnp.zeros((TAB_ROWS, EMB_DIM), jnp.float32)
    tab = tab.at[:VOCAB, :WORD_DIM].set(params["word_emb"])
    tab = tab.at[POS1_OFF:POS1_OFF + POS_VOCAB,
                 WORD_DIM:WORD_DIM + POS_DIM].set(params["pos1_emb"])
    tab = tab.at[POS2_OFF:POS2_OFF + POS_VOCAB,
                 WORD_DIM + POS_DIM:EMB_DIM].set(params["pos2_emb"])
    return {
        "emb_tab": tab,                                               # (128, E)
        "conv_w": params["conv_w"],                                   # (KW, E, H) tap-major
        "conv_b": params["conv_b"],                                   # (1, H)
        "rel_w": jnp.pad(params["rel_w"], ((0, 0), (0, R_PAD - REL_NUM))),  # (H, 128)
        "rel_b": jnp.pad(params["rel_b"], ((0, 0), (0, R_PAD - REL_NUM))),  # (1, 128)
    }


@jax.jit
def model_forward(X, X_Pos1, X_Pos2, kparams, X_Mask=None, X_Len=None):
    """X, X_Pos1, X_Pos2: int32 (B, L). kparams: output of prepare_params.

    Returns (B, REL_NUM) float32 logits.
    """
    del X_Mask, X_Len  # unused by the CNN encoder path (same as the PyTorch module)

    # Flatten indices in the wrapper so the kernel never relayouts (B,L)->(BL,1).
    xw = X.reshape(BL, 1)
    xp1 = X_Pos1.reshape(BL, 1)
    xp2 = X_Pos2.reshape(BL, 1)

    out = pl.pallas_call(
        _fused_model_kernel,
        out_shape=jax.ShapeDtypeStruct((B, R_PAD), jnp.float32),
        grid_spec=pltpu.PrefetchScalarGridSpec(
            num_scalar_prefetch=0,
            grid=(1,),                         # single step: whole batch resident
            in_specs=[
                pl.BlockSpec((BL, 1), lambda i: (0, 0)),
                pl.BlockSpec((BL, 1), lambda i: (0, 0)),
                pl.BlockSpec((BL, 1), lambda i: (0, 0)),
                pl.BlockSpec((TAB_ROWS, EMB_DIM), lambda i: (0, 0)),
                pl.BlockSpec((KW, EMB_DIM, HIDDEN), lambda i: (0, 0, 0)),
                pl.BlockSpec((1, HIDDEN), lambda i: (0, 0)),
                pl.BlockSpec((HIDDEN, R_PAD), lambda i: (0, 0)),
                pl.BlockSpec((1, R_PAD), lambda i: (0, 0)),
            ],
            out_specs=pl.BlockSpec((B, R_PAD), lambda i: (0, 0)),
        ),
        compiler_params=pltpu.CompilerParams(
            dimension_semantics=("arbitrary",)),
    )(xw, xp1, xp2,
      kparams["emb_tab"], kparams["conv_w"], kparams["conv_b"],
      kparams["rel_w"], kparams["rel_b"])

    # Lane-dense kernel output sliced back to the logical width; this slice is
    # fused into the same jitted program as the pallas_call (no extra dispatch).
    return out[:, :REL_NUM]


def _reference_forward(X, X_Pos1, X_Pos2, params):
    """Pure-JAX reference for correctness checking (bias added before max-pool)."""
    w_emb = jnp.take(params["word_emb"], X, axis=0)
    p1 = jnp.take(params["pos1_emb"], X_Pos1, axis=0)
    p2 = jnp.take(params["pos2_emb"], X_Pos2, axis=0)
    emb = jnp.concatenate([w_emb, p1, p2], axis=-1)
    xp = jnp.pad(emb, ((0, 0), (1, 1), (0, 0)))
    conv = sum(jnp.einsum("ble,eh->blh", xp[:, k:k + L, :], params["conv_w"][k])
               for k in range(KW)) + params["conv_b"]
    feat = jnp.maximum(jnp.max(conv, axis=1), 0.0)
    return feat @ params["rel_w"] + params["rel_b"]


def init_params(key):
    ks = jax.random.split(key, 7)

    def xavier(k, shape):
        fan_in, fan_out = shape[-2], shape[-1]
        lim = jnp.sqrt(6.0 / (fan_in + fan_out))
        return jax.random.uniform(k, shape, jnp.float32, -lim, lim)

    return {
        # pretrained-word-vector stand-in (would be np.load(pre_word_vec))
        "word_emb": jax.random.normal(ks[0], (VOCAB, WORD_DIM), jnp.float32) * 0.1,
        "pos1_emb": xavier(ks[1], (POS_VOCAB, POS_DIM)),
        "pos2_emb": xavier(ks[2], (POS_VOCAB, POS_DIM)),
        # Conv1d(E, H, 3): PyTorch weight (H, E, 3) stored here tap-major (3, E, H)
        "conv_w": jax.random.normal(ks[3], (KW, EMB_DIM, HIDDEN), jnp.float32) * 0.05,
        "conv_b": jax.random.normal(ks[4], (1, HIDDEN), jnp.float32) * 0.05,
        # Linear(H, rel_num): PyTorch weight (R, H) stored transposed (H, R)
        "rel_w": xavier(ks[5], (HIDDEN, REL_NUM)),
        "rel_b": jnp.zeros((1, REL_NUM), jnp.float32),
    }
    # TODO(synk): BiGRU / PCNN encoder branches, training-mode dropout and the
    # padding_idx=-1 gradient-freeze semantics are not implemented (CNN eval path only).


if __name__ == "__main__":
    key = jax.random.PRNGKey(0)
    pkey, k1, k2, k3 = jax.random.split(key, 4)
    params = init_params(pkey)
    kernel_params = prepare_params(params)   # one-time, off the per-call hot path

    X = jax.random.randint(k1, (B, L), 0, VOCAB, dtype=jnp.int32)
    X_Pos1 = jax.random.randint(k2, (B, L), 0, POS_VOCAB, dtype=jnp.int32)
    X_Pos2 = jax.random.randint(k3, (B, L), 0, POS_VOCAB, dtype=jnp.int32)

    out = model_forward(X, X_Pos1, X_Pos2, kernel_params)
    jax.block_until_ready(out)

    ref = _reference_forward(X, X_Pos1, X_Pos2, params)
    assert out.shape == (B, REL_NUM)
    assert jnp.allclose(out, ref, atol=1e-4, rtol=1e-4), "mismatch vs reference"

    print("KERNEL_OK")
</pallas_src>

<mosaic_0001>
module attributes {stable_mosaic.version = 11 : i64} {
  func.func @_fused_model_kernel(%arg0: i32, %arg1: memref<32x1xi32, #tpu.memory_space<vmem>>, %arg2: memref<32x1xi32, #tpu.memory_space<vmem>>, %arg3: memref<32x1xi32, #tpu.memory_space<vmem>>, %arg4: memref<128x32xf32, #tpu.memory_space<vmem>>, %arg5: memref<3x32x32xf32, #tpu.memory_space<vmem>>, %arg6: memref<1x32xf32, #tpu.memory_space<vmem>>, %arg7: memref<32x128xf32, #tpu.memory_space<vmem>>, %arg8: memref<1x128xf32, #tpu.memory_space<vmem>>, %arg9: memref<2x128xf32, #tpu.memory_space<vmem>>) attributes {dimension_semantics = [#tpu.dimension_semantics<arbitrary>], iteration_bounds = array<i64: 1>, scalar_prefetch = 0 : i64, scratch_operands = 0 : i64, tpu.core_type = #tpu.core_type<tc>, window_params = [{pipeline_mode = #tpu.pipeline_mode<synchronous>, transform_indices = @transform_0, window_bounds = array<i64: 32, 1>}, {pipeline_mode = #tpu.pipeline_mode<synchronous>, transform_indices = @transform_1, window_bounds = array<i64: 32, 1>}, {pipeline_mode = #tpu.pipeline_mode<synchronous>, transform_indices = @transform_2, window_bounds = array<i64: 32, 1>}, {pipeline_mode = #tpu.pipeline_mode<synchronous>, transform_indices = @transform_3, window_bounds = array<i64: 128, 32>}, {pipeline_mode = #tpu.pipeline_mode<synchronous>, transform_indices = @transform_4, window_bounds = array<i64: 3, 32, 32>}, {pipeline_mode = #tpu.pipeline_mode<synchronous>, transform_indices = @transform_5, window_bounds = array<i64: 1, 32>}, {pipeline_mode = #tpu.pipeline_mode<synchronous>, transform_indices = @transform_6, window_bounds = array<i64: 32, 128>}, {pipeline_mode = #tpu.pipeline_mode<synchronous>, transform_indices = @transform_7, window_bounds = array<i64: 1, 128>}, {pipeline_mode = #tpu.pipeline_mode<synchronous>, transform_indices = @transform_8, window_bounds = array<i64: 2, 128>}]} {
    %0 = tpu.iota {dimensions = array<i32: 1>} : vector<32x128xi32>
    %c0 = arith.constant 0 : index
    %c0_0 = arith.constant 0 : index
    %1 = vector.load %arg1[%c0, %c0_0] : memref<32x1xi32, #tpu.memory_space<vmem>>, vector<32x1xi32>
    %2 = vector.broadcast %1 : vector<32x1xi32> to vector<32x128xi32>
    %3 = arith.cmpi eq, %2, %0 : vector<32x128xi32>
    %c0_1 = arith.constant 0 : index
    %c0_2 = arith.constant 0 : index
    %4 = vector.load %arg2[%c0_1, %c0_2] : memref<32x1xi32, #tpu.memory_space<vmem>>, vector<32x1xi32>
    %c50_i32 = arith.constant 50 : i32
    %5 = vector.broadcast %c50_i32 : i32 to vector<32x1xi32>
    %6 = arith.addi %4, %5 : vector<32x1xi32>
    %7 = vector.broadcast %6 : vector<32x1xi32> to vector<32x128xi32>
    %8 = arith.cmpi eq, %7, %0 : vector<32x128xi32>
    %9 = arith.ori %3, %8 : vector<32x128xi1>
    %c0_3 = arith.constant 0 : index
    %c0_4 = arith.constant 0 : index
    %10 = vector.load %arg3[%c0_3, %c0_4] : memref<32x1xi32, #tpu.memory_space<vmem>>, vector<32x1xi32>
    %c71_i32 = arith.constant 71 : i32
    %11 = vector.broadcast %c71_i32 : i32 to vector<32x1xi32>
    %12 = arith.addi %10, %11 : vector<32x1xi32>
    %13 = vector.broadcast %12 : vector<32x1xi32> to vector<32x128xi32>
    %14 = arith.cmpi eq, %13, %0 : vector<32x128xi32>
    %15 = arith.ori %9, %14 : vector<32x128xi1>
    %16 = arith.extui %15 : vector<32x128xi1> to vector<32x128xi32>
    %17 = arith.sitofp %16 : vector<32x128xi32> to vector<32x128xf32>
    %c0_5 = arith.constant 0 : index
    %c0_6 = arith.constant 0 : index
    %18 = vector.load %arg4[%c0_5, %c0_6] : memref<128x32xf32, #tpu.memory_space<vmem>>, vector<128x32xf32>
    %cst = arith.constant dense<0.000000e+00> : vector<32x32xf32>
    %19 = tpu.matmul %17, %18, %cst {dimension_numbers = #tpu.dot_dimension_numbers<[1], [0], [0], [1], [0, 0, 1, 1], [], []>} : vector<32x128xf32>, vector<128x32xf32>, vector<32x32xf32> -> vector<32x32xf32>
    %20 = tpu.iota {dimensions = array<i32: 0>} : vector<32x32xi32>
    %21 = tpu.iota {dimensions = array<i32: 1>} : vector<32x32xi32>
    %c1_i32 = arith.constant 1 : i32
    %22 = vector.broadcast %c1_i32 : i32 to vector<32x32xi32>
    %23 = arith.addi %21, %22 : vector<32x32xi32>
    %24 = arith.cmpi eq, %23, %20 : vector<32x32xi32>
    %c16_i32 = arith.constant 16 : i32
    %c0_i32 = arith.constant 0 : i32
    %25 = arith.cmpi eq, %c16_i32, %c0_i32 : i32
    %c1_i32_7 = arith.constant 1 : i32
    %26 = arith.select %25, %c1_i32_7, %c16_i32 : i32
    %27 = vector.broadcast %26 : i32 to vector<32x32xi32>
    %28 = arith.remsi %20, %27 : vector<32x32xi32>
    %c0_i32_8 = arith.constant 0 : i32
    %29 = vector.broadcast %c0_i32_8 : i32 to vector<32x32xi32>
    %30 = arith.cmpi ne, %28, %29 : vector<32x32xi32>
    %c0_i32_9 = arith.constant 0 : i32
    %31 = vector.broadcast %c0_i32_9 : i32 to vector<32x32xi32>
    %32 = arith.cmpi slt, %28, %31 : vector<32x32xi32>
    %c0_i32_10 = arith.constant 0 : i32
    %33 = arith.cmpi slt, %26, %c0_i32_10 : i32
    %34 = vector.broadcast %33 : i1 to vector<32x32xi1>
    %35 = vector.broadcast %34 : vector<32x32xi1> to vector<32x32xi1>
    %36 = arith.xori %32, %35 : vector<32x32xi1>
    %37 = arith.andi %36, %30 : vector<32x32xi1>
    %38 = vector.broadcast %26 : i32 to vector<32x32xi32>
    %39 = arith.addi %28, %38 : vector<32x32xi32>
    %40 = arith.select %37, %39, %28 : vector<32x32xi1>, vector<32x32xi32>
    %c0_i32_11 = arith.constant 0 : i32
    %41 = vector.broadcast %c0_i32_11 : i32 to vector<32x32xi32>
    %42 = arith.cmpi ne, %40, %41 : vector<32x32xi32>
    %43 = arith.andi %24, %42 : vector<32x32xi1>
    %44 = arith.extui %43 : vector<32x32xi1> to vector<32x32xi32>
    %45 = arith.sitofp %44 : vector<32x32xi32> to vector<32x32xf32>
    %c1_i32_12 = arith.constant 1 : i32
    %46 = vector.broadcast %c1_i32_12 : i32 to vector<32x32xi32>
    %47 = arith.addi %20, %46 : vector<32x32xi32>
    %48 = arith.cmpi eq, %21, %47 : vector<32x32xi32>
    %c16_i32_13 = arith.constant 16 : i32
    %c0_i32_14 = arith.constant 0 : i32
    %49 = arith.cmpi eq, %c16_i32_13, %c0_i32_14 : i32
    %c1_i32_15 = arith.constant 1 : i32
    %50 = arith.select %49, %c1_i32_15, %c16_i32_13 : i32
    %51 = vector.broadcast %50 : i32 to vector<32x32xi32>
    %52 = arith.remsi %20, %51 : vector<32x32xi32>
    %c0_i32_16 = arith.constant 0 : i32
    %53 = vector.broadcast %c0_i32_16 : i32 to vector<32x32xi32>
    %54 = arith.cmpi ne, %52, %53 : vector<32x32xi32>
    %c0_i32_17 = arith.constant 0 : i32
    %55 = vector.broadcast %c0_i32_17 : i32 to vector<32x32xi32>
    %56 = arith.cmpi slt, %52, %55 : vector<32x32xi32>
    %c0_i32_18 = arith.constant 0 : i32
    %57 = arith.cmpi slt, %50, %c0_i32_18 : i32
    %58 = vector.broadcast %57 : i1 to vector<32x32xi1>
    %59 = vector.broadcast %58 : vector<32x32xi1> to vector<32x32xi1>
    %60 = arith.xori %56, %59 : vector<32x32xi1>
    %61 = arith.andi %60, %54 : vector<32x32xi1>
    %62 = vector.broadcast %50 : i32 to vector<32x32xi32>
    %63 = arith.addi %52, %62 : vector<32x32xi32>
    %64 = arith.select %61, %63, %52 : vector<32x32xi1>, vector<32x32xi32>
    %c15_i32 = arith.constant 15 : i32
    %65 = vector.broadcast %c15_i32 : i32 to vector<32x32xi32>
    %66 = arith.cmpi ne, %64, %65 : vector<32x32xi32>
    %67 = arith.andi %48, %66 : vector<32x32xi1>
    %68 = arith.extui %67 : vector<32x32xi1> to vector<32x32xi32>
    %69 = arith.sitofp %68 : vector<32x32xi32> to vector<32x32xf32>
    %cst_19 = arith.constant dense<0.000000e+00> : vector<32x32xf32>
    %70 = tpu.matmul %45, %19, %cst_19 {dimension_numbers = #tpu.dot_dimension_numbers<[1], [0], [0], [1], [0, 0, 1, 1], [], []>} : vector<32x32xf32>, vector<32x32xf32>, vector<32x32xf32> -> vector<32x32xf32>
    %cst_20 = arith.constant dense<0.000000e+00> : vector<32x32xf32>
    %71 = tpu.matmul %69, %19, %cst_20 {dimension_numbers = #tpu.dot_dimension_numbers<[1], [0], [0], [1], [0, 0, 1, 1], [], []>} : vector<32x32xf32>, vector<32x32xf32>, vector<32x32xf32> -> vector<32x32xf32>
    %c0_21 = arith.constant 0 : index
    %c0_22 = arith.constant 0 : index
    %c0_23 = arith.constant 0 : index
    %72 = vector.load %arg5[%c0_21, %c0_22, %c0_23] : memref<3x32x32xf32, #tpu.memory_space<vmem>>, vector<1x32x32xf32>
    %73 = vector.shape_cast %72 : vector<1x32x32xf32> to vector<32x32xf32>
    %cst_24 = arith.constant dense<0.000000e+00> : vector<32x32xf32>
    %74 = tpu.matmul %70, %73, %cst_24 {dimension_numbers = #tpu.dot_dimension_numbers<[1], [0], [0], [1], [0, 0, 1, 1], [], []>} : vector<32x32xf32>, vector<32x32xf32>, vector<32x32xf32> -> vector<32x32xf32>
    %c1 = arith.constant 1 : index
    %c0_25 = arith.constant 0 : index
    %c0_26 = arith.constant 0 : index
    %75 = vector.load %arg5[%c1, %c0_25, %c0_26] : memref<3x32x32xf32, #tpu.memory_space<vmem>>, vector<1x32x32xf32>
    %76 = vector.shape_cast %75 : vector<1x32x32xf32> to vector<32x32xf32>
    %cst_27 = arith.constant dense<0.000000e+00> : vector<32x32xf32>
    %77 = tpu.matmul %19, %76, %cst_27 {dimension_numbers = #tpu.dot_dimension_numbers<[1], [0], [0], [1], [0, 0, 1, 1], [], []>} : vector<32x32xf32>, vector<32x32xf32>, vector<32x32xf32> -> vector<32x32xf32>
    %78 = arith.addf %74, %77 : vector<32x32xf32>
    %c2 = arith.constant 2 : index
    %c0_28 = arith.constant 0 : index
    %c0_29 = arith.constant 0 : index
    %79 = vector.load %arg5[%c2, %c0_28, %c0_29] : memref<3x32x32xf32, #tpu.memory_space<vmem>>, vector<1x32x32xf32>
    %80 = vector.shape_cast %79 : vector<1x32x32xf32> to vector<32x32xf32>
    %cst_30 = arith.constant dense<0.000000e+00> : vector<32x32xf32>
    %81 = tpu.matmul %71, %80, %cst_30 {dimension_numbers = #tpu.dot_dimension_numbers<[1], [0], [0], [1], [0, 0, 1, 1], [], []>} : vector<32x32xf32>, vector<32x32xf32>, vector<32x32xf32> -> vector<32x32xf32>
    %82 = arith.addf %78, %81 : vector<32x32xf32>
    %83 = vector.shape_cast %82 : vector<32x32xf32> to vector<2x16x32xf32>
    %cst_31 = arith.constant dense<0xFF800000> : vector<2x32xf32>
    %84 = vector.multi_reduction <maximumf>, %83, %cst_31 [1] : vector<2x16x32xf32> to vector<2x32xf32>
    %c0_32 = arith.constant 0 : index
    %c0_33 = arith.constant 0 : index
    %85 = vector.load %arg6[%c0_32, %c0_33] : memref<1x32xf32, #tpu.memory_space<vmem>>, vector<1x32xf32>
    %86 = vector.broadcast %85 : vector<1x32xf32> to vector<2x32xf32>
    %87 = arith.addf %84, %86 : vector<2x32xf32>
    %cst_34 = arith.constant 0.000000e+00 : f32
    %88 = vector.broadcast %cst_34 : f32 to vector<2x32xf32>
    %89 = arith.maximumf %87, %88 : vector<2x32xf32>
    %c0_35 = arith.constant 0 : index
    %c0_36 = arith.constant 0 : index
    %90 = vector.load %arg7[%c0_35, %c0_36] : memref<32x128xf32, #tpu.memory_space<vmem>>, vector<32x128xf32>
    %cst_37 = arith.constant dense<0.000000e+00> : vector<2x128xf32>
    %91 = tpu.matmul %89, %90, %cst_37 {dimension_numbers = #tpu.dot_dimension_numbers<[1], [0], [0], [1], [0, 0, 1, 1], [], []>} : vector<2x32xf32>, vector<32x128xf32>, vector<2x128xf32> -> vector<2x128xf32>
    %c0_38 = arith.constant 0 : index
    %c0_39 = arith.constant 0 : index
    %92 = vector.load %arg8[%c0_38, %c0_39] : memref<1x128xf32, #tpu.memory_space<vmem>>, vector<1x128xf32>
    %93 = vector.broadcast %92 : vector<1x128xf32> to vector<2x128xf32>
    %94 = arith.addf %91, %93 : vector<2x128xf32>
    %c0_40 = arith.constant 0 : index
    %c0_41 = arith.constant 0 : index
    %95 = vector.load %arg9[%c0_40, %c0_41] : memref<2x128xf32, #tpu.memory_space<vmem>>, vector<2x128xf32>
    tpu.vector_store %arg9[%c0_40, %c0_41], %94 {strides = array<i32>} : memref<2x128xf32, #tpu.memory_space<vmem>>, vector<2x128xf32>,
    return
  }
  func.func @transform_0(%arg0: i32) -> (i32, i32) {
    %c0_i32 = arith.constant 0 : i32
    %c0_i32_0 = arith.constant 0 : i32
    %c0_i32_1 = arith.constant 0 : i32
    return %c0_i32, %c0_i32_0 : i32, i32
  }
  func.func @transform_1(%arg0: i32) -> (i32, i32) {
    %c0_i32 = arith.constant 0 : i32
    %c0_i32_0 = arith.constant 0 : i32
    %c0_i32_1 = arith.constant 0 : i32
    return %c0_i32, %c0_i32_0 : i32, i32
  }
  func.func @transform_2(%arg0: i32) -> (i32, i32) {
    %c0_i32 = arith.constant 0 : i32
    %c0_i32_0 = arith.constant 0 : i32
    %c0_i32_1 = arith.constant 0 : i32
    return %c0_i32, %c0_i32_0 : i32, i32
  }
  func.func @transform_3(%arg0: i32) -> (i32, i32) {
    %c0_i32 = arith.constant 0 : i32
    %c0_i32_0 = arith.constant 0 : i32
    %c0_i32_1 = arith.constant 0 : i32
    return %c0_i32, %c0_i32_0 : i32, i32
  }
  func.func @transform_4(%arg0: i32) -> (i32, i32, i32) {
    %c0_i32 = arith.constant 0 : i32
    %c0_i32_0 = arith.constant 0 : i32
    %c0_i32_1 = arith.constant 0 : i32
    %c0_i32_2 = arith.constant 0 : i32
    return %c0_i32, %c0_i32_0, %c0_i32_1 : i32, i32, i32
  }
  func.func @transform_5(%arg0: i32) -> (i32, i32) {
    %c0_i32 = arith.constant 0 : i32
    %c0_i32_0 = arith.constant 0 : i32
    %c0_i32_1 = arith.constant 0 : i32
    return %c0_i32, %c0_i32_0 : i32, i32
  }
  func.func @transform_6(%arg0: i32) -> (i32, i32) {
    %c0_i32 = arith.constant 0 : i32
    %c0_i32_0 = arith.constant 0 : i32
    %c0_i32_1 = arith.constant 0 : i32
    return %c0_i32, %c0_i32_0 : i32, i32
  }
  func.func @transform_7(%arg0: i32) -> (i32, i32) {
    %c0_i32 = arith.constant 0 : i32
    %c0_i32_0 = arith.constant 0 : i32
    %c0_i32_1 = arith.constant 0 : i32
    return %c0_i32, %c0_i32_0 : i32, i32
  }
  func.func @transform_8(%arg0: i32) -> (i32, i32) {
    %c0_i32 = arith.constant 0 : i32
    %c0_i32_0 = arith.constant 0 : i32
    %c0_i32_1 = arith.constant 0 : i32
    return %c0_i32, %c0_i32_0 : i32, i32
  }
}

</mosaic_0001>

<llo_original>
// kernel: model_forward.1
$region0: #{model_forward.1}
  #allocation0 [shape = 'u32[]', space=smem, size = 0x4, offset = 0x4, fixed_abs, tag = 'smem constant byte address 0x4 - core index']
  #allocation1 [shape = 'u32[144,128]{1,0:T(1,128)}', space=vmem, size = 0x12000, scoped, tag = 'internal scratch']
  %s0 = inlined_call_operand.vmem [shape: s32[32,1], index: 0, kind: input, shape index: {}]
  %s1 = inlined_call_operand.vmem [shape: s32[32,1], index: 1, kind: input, shape index: {}]
  %s2 = inlined_call_operand.vmem [shape: s32[32,1], index: 2, kind: input, shape index: {}]
  %s3 = inlined_call_operand.vmem [shape: f32[128,32], index: 3, kind: input, shape index: {}]
  %s4 = inlined_call_operand.vmem [shape: f32[3,32,32], index: 4, kind: input, shape index: {}]
  %s5 = inlined_call_operand.vmem [shape: f32[1,32], index: 5, kind: input, shape index: {}]
  %s6 = inlined_call_operand.vmem [shape: f32[32,128], index: 6, kind: input, shape index: {}]
  %s7 = inlined_call_operand.vmem [shape: f32[1,128], index: 7, kind: input, shape index: {}]
  %s8 = inlined_call_operand.hbm [shape: f32[2,128], index: 8, kind: output, shape index: {}]
  %s9 = sld [smem:[#allocation0]]
  $region42: #{model_forward.1} parent=0
    _
  %s11 = ssub.s32 1, %s9
  %s12 = scalar_select 0, %s11, %s9
  $region1: #{model_forward.1} parent=0
    #allocation2 [shape = 'u8[1024]{0}', space=vmem, size = 0x400, scoped, tag = 'output window, operand 0, single buffered']
    #allocation3 [shape = 's32[1]{0}', space=sflag, size = 0x4, scoped, tag = 'scoped memory for model_forward.1']
    %13 = vsyncpa [#allocation3], 0
    // Predicated region
    $region2: #{model_forward.1} parent=1 // pred_check
      _
    $region3: #{model_forward.1} parent=1 // pred_check_branch
      %15 = sbr.rel (0) target = $region5
    $region4: #{model_forward.1} parent=1 // pred_region
      _
    $region5: #{model_forward.1} parent=1 // pred_fallthru
      _
    // Predicated region
    $region6: #{model_forward.1} parent=1 // pred_check
      _
    $region7: #{model_forward.1} parent=1 // pred_check_branch
      %17 = sbr.rel (0) target = $region9
    $region8: #{model_forward.1} parent=1 // pred_region
      _
    $region9: #{model_forward.1} parent=1 // pred_fallthru
      _
    // Predicated region
    $region10: #{model_forward.1} parent=1 // pred_check
      _
    $region11: #{model_forward.1} parent=1 // pred_check_branch
      %19 = sbr.rel (0) target = $region13
    $region12: #{model_forward.1} parent=1 // pred_region
      _
    $region13: #{model_forward.1} parent=1 // pred_fallthru
      _
    // Predicated region
    $region14: #{model_forward.1} parent=1 // pred_check
      _
    $region15: #{model_forward.1} parent=1 // pred_check_branch
      %21 = sbr.rel (0) target = $region17
    $region16: #{model_forward.1} parent=1 // pred_region
      _
    $region17: #{model_forward.1} parent=1 // pred_fallthru
      _
    // Predicated region
    $region18: #{model_forward.1} parent=1 // pred_check
      _
    $region19: #{model_forward.1} parent=1 // pred_check_branch
      %23 = sbr.rel (0) target = $region21
    $region20: #{model_forward.1} parent=1 // pred_region
      _
    $region21: #{model_forward.1} parent=1 // pred_fallthru
      _
    // Predicated region
    $region22: #{model_forward.1} parent=1 // pred_check
      _
    $region23: #{model_forward.1} parent=1 // pred_check_branch
      %25 = sbr.rel (0) target = $region25
    $region24: #{model_forward.1} parent=1 // pred_region
      _
    $region25: #{model_forward.1} parent=1 // pred_fallthru
      _
    // Predicated region
    $region26: #{model_forward.1} parent=1 // pred_check
      _
    $region27: #{model_forward.1} parent=1 // pred_check_branch
      %27 = sbr.rel (0) target = $region29
    $region28: #{model_forward.1} parent=1 // pred_region
      _
    $region29: #{model_forward.1} parent=1 // pred_fallthru
      _
    // Predicated region
    $region30: #{model_forward.1} parent=1 // pred_check
      _
    $region31: #{model_forward.1} parent=1 // pred_check_branch
      %29 = sbr.rel (0) target = $region33
    $region32: #{model_forward.1} parent=1 // pred_region
      _
    $region33: #{model_forward.1} parent=1 // pred_fallthru
      _
    %v30 = vlaneseq
    %v31 = vand.u32 %v30, 127
    %v32 = vld [vmem:[%s0] sm:$0xff]
    %v33 = vld [vmem:[%s0 + $0x8] sm:$0xff]
    %v34 = vld [vmem:[%s0 + $0x10] sm:$0xff]
    %v35 = vld [vmem:[%s0 + $0x18] sm:$0xff]
    %36 = vset.pattern.permute.xlu0 0
    %37 = vperm.xlu0 %36, %v32
    %v38 = vpop.permute.xlu0 %37
    %39 = vset.pattern.permute.xlu0 0
    %40 = vperm.xlu0 %39, %v33
    %v41 = vpop.permute.xlu0 %40
    %42 = vset.pattern.permute.xlu0 0
    %43 = vperm.xlu0 %42, %v34
    %v44 = vpop.permute.xlu0 %43
    %45 = vset.pattern.permute.xlu0 0
    %46 = vperm.xlu0 %45, %v35
    %v47 = vpop.permute.xlu0 %46
    %vm48 = vcmp.eq.s32.totalorder %v38, %v31
    %vm49 = vcmp.eq.s32.totalorder %v41, %v31
    %vm50 = vcmp.eq.s32.totalorder %v44, %v31
    %vm51 = vcmp.eq.s32.totalorder %v47, %v31
    %v52 = vld [vmem:[%s1] sm:$0xff]
    %v53 = vld [vmem:[%s1 + $0x8] sm:$0xff]
    %v54 = vld [vmem:[%s1 + $0x10] sm:$0xff]
    %v55 = vld [vmem:[%s1 + $0x18] sm:$0xff]
    %v56 = vadd.s32 %v52, 50
    %v57 = vadd.s32 %v53, 50
    %v58 = vadd.s32 %v54, 50
    %v59 = vadd.s32 %v55, 50
    %60 = vset.pattern.permute.xlu0 0
    %61 = vperm.xlu0 %60, %v56
    %v62 = vpop.permute.xlu0 %61
    %63 = vset.pattern.permute.xlu0 0
    %64 = vperm.xlu0 %63, %v57
    %v65 = vpop.permute.xlu0 %64
    %66 = vset.pattern.permute.xlu0 0
    %67 = vperm.xlu0 %66, %v58
    %v68 = vpop.permute.xlu0 %67
    %69 = vset.pattern.permute.xlu0 0
    %70 = vperm.xlu0 %69, %v59
    %v71 = vpop.permute.xlu0 %70
    %vm72 = vcmp.eq.s32.totalorder %v62, %v31
    %vm73 = vcmp.eq.s32.totalorder %v65, %v31
    %vm74 = vcmp.eq.s32.totalorder %v68, %v31
    %vm75 = vcmp.eq.s32.totalorder %v71, %v31
    %vm76 = vmor %vm48, %vm72
    %vm77 = vmor %vm49, %vm73
    %vm78 = vmor %vm50, %vm74
    %vm79 = vmor %vm51, %vm75
    %v80 = vld [vmem:[%s2] sm:$0xff]
    %v81 = vld [vmem:[%s2 + $0x8] sm:$0xff]
    %v82 = vld [vmem:[%s2 + $0x10] sm:$0xff]
    %v83 = vld [vmem:[%s2 + $0x18] sm:$0xff]
    %v84 = vadd.s32 %v80, 71
    %v85 = vadd.s32 %v81, 71
    %v86 = vadd.s32 %v82, 71
    %v87 = vadd.s32 %v83, 71
    %88 = vset.pattern.permute.xlu0 0
    %89 = vperm.xlu0 %88, %v84
    %v90 = vpop.permute.xlu0 %89
    %91 = vset.pattern.permute.xlu0 0
    %92 = vperm.xlu0 %91, %v85
    %v93 = vpop.permute.xlu0 %92
    %94 = vset.pattern.permute.xlu0 0
    %95 = vperm.xlu0 %94, %v86
    %v96 = vpop.permute.xlu0 %95
    %97 = vset.pattern.permute.xlu0 0
    %98 = vperm.xlu0 %97, %v87
    %v99 = vpop.permute.xlu0 %98
    %vm100 = vcmp.eq.s32.totalorder %v90, %v31
    %vm101 = vcmp.eq.s32.totalorder %v93, %v31
    %vm102 = vcmp.eq.s32.totalorder %v96, %v31
    %vm103 = vcmp.eq.s32.totalorder %v99, %v31
    %vm104 = vmor %vm76, %vm100
    %vm105 = vmor %vm77, %vm101
    %vm106 = vmor %vm78, %vm102
    %vm107 = vmor %vm79, %vm103
    %v108 = vsel %vm104, 1, 0
    %v109 = vsel %vm105, 1, 0
    %v110 = vsel %vm106, 1, 0
    %v111 = vsel %vm107, 1, 0
    %v112 = vcvt.s32.f32 %v108
    %v113 = vcvt.s32.f32 %v109
    %v114 = vcvt.s32.f32 %v110
    %v115 = vcvt.s32.f32 %v111
    %v116 = vld [vmem:[%s3] sm:$0xff]
    %v117 = vld [vmem:[%s3 + $0x8] sm:$0xff]
    %v118 = vld [vmem:[%s3 + $0x10] sm:$0xff]
    %v119 = vld [vmem:[%s3 + $0x18] sm:$0xff]
    %v120 = vld [vmem:[%s3 + $0x20] sm:$0xff]
    %v121 = vld [vmem:[%s3 + $0x28] sm:$0xff]
    %v122 = vld [vmem:[%s3 + $0x30] sm:$0xff]
    %v123 = vld [vmem:[%s3 + $0x38] sm:$0xff]
    %v124 = vld [vmem:[%s3 + $0x40] sm:$0xff]
    %v125 = vld [vmem:[%s3 + $0x48] sm:$0xff]
    %v126 = vld [vmem:[%s3 + $0x50] sm:$0xff]
    %v127 = vld [vmem:[%s3 + $0x58] sm:$0xff]
    %v128 = vld [vmem:[%s3 + $0x60] sm:$0xff]
    %v129 = vld [vmem:[%s3 + $0x68] sm:$0xff]
    %v130 = vld [vmem:[%s3 + $0x70] sm:$0xff]
    %v131 = vld [vmem:[%s3 + $0x78] sm:$0xff]
    %132 = vmatprep.subr.mxu0 0.0
    %133 = vmatpush1.msra.mxu0 %v116
    %134 = vmatprep.subr.mxu0 0.0
    %135 = vmatpush1.msra.mxu0 %v117
    %136 = vmatprep.subr.mxu0 0.0
    %137 = vmatpush1.msra.mxu0 %v118
    %138 = vmatprep.subr.mxu0 0.0
    %139 = vmatpush1.msra.mxu0 %v119
    %140 = vmatprep.subr.mxu0 0.0
    %141 = vmatpush1.msra.mxu0 %v120
    %142 = vmatprep.subr.mxu0 0.0
    %143 = vmatpush1.msra.mxu0 %v121
    %144 = vmatprep.subr.mxu0 0.0
    %145 = vmatpush1.msra.mxu0 %v122
    %146 = vmatprep.subr.mxu0 0.0
    %147 = vmatpush1.msra.mxu0 %v123
    %148 = vmatprep.subr.mxu0 0.0
    %149 = vmatpush1.msra.mxu0 %v124
    %150 = vmatprep.subr.mxu0 0.0
    %151 = vmatpush1.msra.mxu0 %v125
    %152 = vmatprep.subr.mxu0 0.0
    %153 = vmatpush1.msra.mxu0 %v126
    %154 = vmatprep.subr.mxu0 0.0
    %155 = vmatpush1.msra.mxu0 %v127
    %156 = vmatprep.subr.mxu0 0.0
    %157 = vmatpush1.msra.mxu0 %v128
    %158 = vmatprep.subr.mxu0 0.0
    %159 = vmatpush1.msra.mxu0 %v129
    %160 = vmatprep.subr.mxu0 0.0
    %161 = vmatpush1.msra.mxu0 %v130
    %162 = vmatprep.subr.mxu0 0.0
    %163 = vmatpush1.msra.mxu0 %v131
    %164 = vmatprep.subr.mxu0 0.0
    %165 = vmatpush1.msra.mxu0 0.0
    %166 = vmatprep.subr.mxu0 0.0
    %167 = vmatpush1.msra.mxu0 0.0
    %168 = vmatprep.subr.mxu0 0.0
    %169 = vmatpush1.msra.mxu0 0.0
    %170 = vmatprep.subr.mxu0 0.0
    %171 = vmatpush1.msra.mxu0 0.0
    %172 = vmatprep.subr.mxu0 0.0
    %173 = vmatpush1.msra.mxu0 0.0
    %174 = vmatprep.subr.mxu0 0.0
    %175 = vmatpush1.msra.mxu0 0.0
    %176 = vmatprep.subr.mxu0 0.0
    %177 = vmatpush1.msra.mxu0 0.0
    %178 = vmatprep.subr.mxu0 0.0
    %179 = vmatpush1.msra.mxu0 0.0
    %180 = vmatprep.subr.mxu0 0.0
    %181 = vmatpush1.msra.mxu0 0.0
    %182 = vmatprep.subr.mxu0 0.0
    %183 = vmatpush1.msra.mxu0 0.0
    %184 = vmatprep.subr.mxu0 0.0
    %185 = vmatpush1.msra.mxu0 0.0
    %186 = vmatprep.subr.mxu0 0.0
    %187 = vmatpush1.msra.mxu0 0.0
    %188 = vmatprep.subr.mxu0 0.0
    %189 = vmatpush1.msra.mxu0 0.0
    %190 = vmatprep.subr.mxu0 0.0
    %191 = vmatpush1.msra.mxu0 0.0
    %192 = vmatprep.subr.mxu0 0.0
    %193 = vmatpush1.msra.mxu0 0.0
    %194 = vmatprep.subr.mxu0 0.0
    %195 = vmatpush1.msra.mxu0 0.0
    %196 = vmatprep.mubr.f32.mxu0 0.0
    %197 = vmatmul.mubr.f32.gmra.mrb[0].mxu0 %v112
    %v198 = vpop.f32.mrb[0].mxu0
    %v199 = vadd.f32 0.0, %v198
    %v200 = vpop.f32.mrb[0].mxu0
    %201 = vmatprep.mubr.f32.mxu0 0.0
    %202 = vmatmul.mubr.f32.gmra.mrb[0].mxu0 %v113
    %v203 = vpop.f32.mrb[0].mxu0
    %v204 = vadd.f32 0.0, %v203
    %v205 = vpop.f32.mrb[0].mxu0
    %206 = vmatprep.mubr.f32.mxu0 0.0
    %207 = vmatmul.mubr.f32.gmra.mrb[0].mxu0 %v114
    %v208 = vpop.f32.mrb[0].mxu0
    %v209 = vadd.f32 0.0, %v208
    %v210 = vpop.f32.mrb[0].mxu0
    %211 = vmatprep.mubr.f32.mxu0 0.0
    %212 = vmatmul.mubr.f32.gmra.mrb[0].mxu0 %v115
    %v213 = vpop.f32.mrb[0].mxu0
    %v214 = vadd.f32 0.0, %v213
    %v215 = vpop.f32.mrb[0].mxu0
    %216 = vdwg.mxu0
    %v217 = vlaneseq
    %v218 = vshrl.u32 %v217, 7
    %v219 = vadd.s32 %v218, 8
    %v220 = vadd.s32 %v218, 16
    %v221 = vadd.s32 %v218, 24
    %v222 = vadd.s32 %v31, 1
    %vm223 = vcmp.eq.s32.totalorder %v222, %v218
    %vm224 = vcmp.eq.s32.totalorder %v222, %v219
    %vm225 = vcmp.eq.s32.totalorder %v222, %v220
    %vm226 = vcmp.eq.s32.totalorder %v222, %v221
    %vm227 = vcmp.lt.s32.totalorder %v218, 0
    %v228 = vsub.s32 0, %v218
    %v229 = vsel %vm227, %v228, %v218
    %v230 = vshrl.u32 %v229, 4
    %v231 = vand.u32 %v229, 15
    %v232 = vsub.s32 0, %v231
    %v233 = vsel %vm227, %v232, %v231
    %vm234 = vcmp.lt.s32.totalorder %v219, 0
    %v235 = vsub.s32 0, %v219
    %v236 = vsel %vm234, %v235, %v219
    %v237 = vshrl.u32 %v236, 4
    %v238 = vand.u32 %v236, 15
    %v239 = vsub.s32 0, %v238
    %v240 = vsel %vm234, %v239, %v238
    %vm241 = vcmp.lt.s32.totalorder %v220, 0
    %v242 = vsub.s32 0, %v220
    %v243 = vsel %vm241, %v242, %v220
    %v244 = vshrl.u32 %v243, 4
    %v245 = vand.u32 %v243, 15
    %v246 = vsub.s32 0, %v245
    %v247 = vsel %vm241, %v246, %v245
    %vm248 = vcmp.lt.s32.totalorder %v221, 0
    %v249 = vsub.s32 0, %v221
    %v250 = vsel %vm248, %v249, %v221
    %v251 = vshrl.u32 %v250, 4
    %v252 = vand.u32 %v250, 15
    %v253 = vsub.s32 0, %v252
    %v254 = vsel %vm248, %v253, %v252
    %vm255 = vcmp.ne.s32.totalorder %v233, 0
    %vm256 = vcmp.ne.s32.totalorder %v240, 0
    %vm257 = vcmp.ne.s32.totalorder %v247, 0
    %vm258 = vcmp.ne.s32.totalorder %v254, 0
    %vm259 = vcmp.lt.s32.totalorder %v233, 0
    %vm260 = vcmp.lt.s32.totalorder %v240, 0
    %vm261 = vcmp.lt.s32.totalorder %v247, 0
    %vm262 = vcmp.lt.s32.totalorder %v254, 0
    %vm263 = vmand %vm259, %vm255
    %vm264 = vmand %vm260, %vm256
    %vm265 = vmand %vm261, %vm257
    %vm266 = vmand %vm262, %vm258
    %v267 = vadd.s32 %v233, 16
    %v268 = vadd.s32 %v240, 16
    %v269 = vadd.s32 %v247, 16
    %v270 = vadd.s32 %v254, 16
    %v271 = vsel %vm263, %v267, %v233
    %v272 = vsel %vm264, %v268, %v240
    %v273 = vsel %vm265, %v269, %v247
    %v274 = vsel %vm266, %v270, %v254
    %vm275 = vcmp.ne.s32.totalorder %v271, 0
    %vm276 = vcmp.ne.s32.totalorder %v272, 0
    %vm277 = vcmp.ne.s32.totalorder %v273, 0
    %vm278 = vcmp.ne.s32.totalorder %v274, 0
    %vm279 = vmand %vm223, %vm275
    %vm280 = vmand %vm224, %vm276
    %vm281 = vmand %vm225, %vm277
    %vm282 = vmand %vm226, %vm278
    %v283 = vsel %vm279, 1, 0
    %v284 = vsel %vm280, 1, 0
    %v285 = vsel %vm281, 1, 0
    %v286 = vsel %vm282, 1, 0
    %v287 = vcvt.s32.f32 %v283
    %v288 = vcvt.s32.f32 %v284
    %v289 = vcvt.s32.f32 %v285
    %v290 = vcvt.s32.f32 %v286
    %v291 = vadd.s32 %v218, 1
    %v292 = vadd.s32 %v219, 1
    %v293 = vadd.s32 %v220, 1
    %v294 = vadd.s32 %v221, 1
    %vm295 = vcmp.eq.s32.totalorder %v31, %v291
    %vm296 = vcmp.eq.s32.totalorder %v31, %v292
    %vm297 = vcmp.eq.s32.totalorder %v31, %v293
    %vm298 = vcmp.eq.s32.totalorder %v31, %v294
    %vm299 = vcmp.ne.s32.totalorder %v271, 15
    %vm300 = vcmp.ne.s32.totalorder %v272, 15
    %vm301 = vcmp.ne.s32.totalorder %v273, 15
    %vm302 = vcmp.ne.s32.totalorder %v274, 15
    %vm303 = vmand %vm295, %vm299
    %vm304 = vmand %vm296, %vm300
    %vm305 = vmand %vm297, %vm301
    %vm306 = vmand %vm298, %vm302
    %v307 = vsel %vm303, 1, 0
    %v308 = vsel %vm304, 1, 0
    %v309 = vsel %vm305, 1, 0
    %v310 = vsel %vm306, 1, 0
    %v311 = vcvt.s32.f32 %v307
    %v312 = vcvt.s32.f32 %v308
    %v313 = vcvt.s32.f32 %v309
    %v314 = vcvt.s32.f32 %v310
    %vm315 = vcmask 261120
    %v317 = vsel %vm315, %v287, 0
    %v320 = vsel %vm315, %v288, 0
    %v323 = vsel %vm315, %v289, 0
    %v326 = vsel %vm315, %v290, 0
    %328 = vmatprep.subr.mxu0 0.0
    %329 = vmatpush1.msra.mxu0 %v199
    %330 = vmatprep.subr.mxu0 0.0
    %331 = vmatpush1.msra.mxu0 %v204
    %332 = vmatprep.subr.mxu0 0.0
    %333 = vmatpush1.msra.mxu0 %v209
    %334 = vmatprep.subr.mxu0 0.0
    %335 = vmatpush1.msra.mxu0 %v214
    %336 = vmatprep.subr.mxu0 0.0
    %337 = vmatpush1.msra.mxu0 0.0
    %338 = vmatprep.subr.mxu0 0.0
    %339 = vmatpush1.msra.mxu0 0.0
    %340 = vmatprep.subr.mxu0 0.0
    %341 = vmatpush1.msra.mxu0 0.0
    %342 = vmatprep.subr.mxu0 0.0
    %343 = vmatpush1.msra.mxu0 0.0
    %344 = vmatprep.subr.mxu0 0.0
    %345 = vmatpush1.msra.mxu0 0.0
    %346 = vmatprep.subr.mxu0 0.0
    %347 = vmatpush1.msra.mxu0 0.0
    %348 = vmatprep.subr.mxu0 0.0
    %349 = vmatpush1.msra.mxu0 0.0
    %350 = vmatprep.subr.mxu0 0.0
    %351 = vmatpush1.msra.mxu0 0.0
    %352 = vmatprep.subr.mxu0 0.0
    %353 = vmatpush1.msra.mxu0 0.0
    %354 = vmatprep.subr.mxu0 0.0
    %355 = vmatpush1.msra.mxu0 0.0
    %356 = vmatprep.subr.mxu0 0.0
    %357 = vmatpush1.msra.mxu0 0.0
    %358 = vmatprep.subr.mxu0 0.0
    %359 = vmatpush1.msra.mxu0 0.0
    %360 = vmatprep.subr.mxu0 0.0
    %361 = vmatpush1.msra.mxu0 0.0
    %362 = vmatprep.subr.mxu0 0.0
    %363 = vmatpush1.msra.mxu0 0.0
    %364 = vmatprep.subr.mxu0 0.0
    %365 = vmatpush1.msra.mxu0 0.0
    %366 = vmatprep.subr.mxu0 0.0
    %367 = vmatpush1.msra.mxu0 0.0
    %368 = vmatprep.subr.mxu0 0.0
    %369 = vmatpush1.msra.mxu0 0.0
    %370 = vmatprep.subr.mxu0 0.0
    %371 = vmatpush1.msra.mxu0 0.0
    %372 = vmatprep.subr.mxu0 0.0
    %373 = vmatpush1.msra.mxu0 0.0
    %374 = vmatprep.subr.mxu0 0.0
    %375 = vmatpush1.msra.mxu0 0.0
    %376 = vmatprep.subr.mxu0 0.0
    %377 = vmatpush1.msra.mxu0 0.0
    %378 = vmatprep.subr.mxu0 0.0
    %379 = vmatpush1.msra.mxu0 0.0
    %380 = vmatprep.subr.mxu0 0.0
    %381 = vmatpush1.msra.mxu0 0.0
    %382 = vmatprep.subr.mxu0 0.0
    %383 = vmatpush1.msra.mxu0 0.0
    %384 = vmatprep.subr.mxu0 0.0
    %385 = vmatpush1.msra.mxu0 0.0
    %386 = vmatprep.subr.mxu0 0.0
    %387 = vmatpush1.msra.mxu0 0.0
    %388 = vmatprep.subr.mxu0 0.0
    %389 = vmatpush1.msra.mxu0 0.0
    %390 = vmatprep.subr.mxu0 0.0
    %391 = vmatpush1.msra.mxu0 0.0
    %392 = vmatprep.mubr.f32.mxu0 0.0
    %393 = vmatmul.mubr.f32.gmra.mrb[0].mxu0 %v317
    %v394 = vpop.f32.mrb[0].mxu0
    %v395 = vadd.f32 0.0, %v394
    %v396 = vpop.f32.mrb[0].mxu0
    %397 = vmatprep.mubr.f32.mxu0 0.0
    %398 = vmatmul.mubr.f32.gmra.mrb[0].mxu0 %v320
    %v399 = vpop.f32.mrb[0].mxu0
    %v400 = vadd.f32 0.0, %v399
    %v401 = vpop.f32.mrb[0].mxu0
    %402 = vmatprep.mubr.f32.mxu0 0.0
    %403 = vmatmul.mubr.f32.gmra.mrb[0].mxu0 %v323
    %v404 = vpop.f32.mrb[0].mxu0
    %v405 = vadd.f32 0.0, %v404
    %v406 = vpop.f32.mrb[0].mxu0
    %407 = vmatprep.mubr.f32.mxu0 0.0
    %408 = vmatmul.mubr.f32.gmra.mrb[0].mxu0 %v326
    %v409 = vpop.f32.mrb[0].mxu0
    %v410 = vadd.f32 0.0, %v409
    %v411 = vpop.f32.mrb[0].mxu0
    %412 = vdwg.mxu0
    %v414 = vsel %vm315, %v311, 0
    %v417 = vsel %vm315, %v312, 0
    %v420 = vsel %vm315, %v313, 0
    %v423 = vsel %vm315, %v314, 0
    %425 = vmatprep.subr.mxu0 0.0
    %426 = vmatpush1.msra.mxu0 %v199
    %427 = vmatprep.subr.mxu0 0.0
    %428 = vmatpush1.msra.mxu0 %v204
    %429 = vmatprep.subr.mxu0 0.0
    %430 = vmatpush1.msra.mxu0 %v209
    %431 = vmatprep.subr.mxu0 0.0
    %432 = vmatpush1.msra.mxu0 %v214
    %433 = vmatprep.subr.mxu0 0.0
    %434 = vmatpush1.msra.mxu0 0.0
    %435 = vmatprep.subr.mxu0 0.0
    %436 = vmatpush1.msra.mxu0 0.0
    %437 = vmatprep.subr.mxu0 0.0
    %438 = vmatpush1.msra.mxu0 0.0
    %439 = vmatprep.subr.mxu0 0.0
    %440 = vmatpush1.msra.mxu0 0.0
    %441 = vmatprep.subr.mxu0 0.0
    %442 = vmatpush1.msra.mxu0 0.0
    %443 = vmatprep.subr.mxu0 0.0
    %444 = vmatpush1.msra.mxu0 0.0
    %445 = vmatprep.subr.mxu0 0.0
    %446 = vmatpush1.msra.mxu0 0.0
    %447 = vmatprep.subr.mxu0 0.0
    %448 = vmatpush1.msra.mxu0 0.0
    %449 = vmatprep.subr.mxu0 0.0
    %450 = vmatpush1.msra.mxu0 0.0
    %451 = vmatprep.subr.mxu0 0.0
    %452 = vmatpush1.msra.mxu0 0.0
    %453 = vmatprep.subr.mxu0 0.0
    %454 = vmatpush1.msra.mxu0 0.0
    %455 = vmatprep.subr.mxu0 0.0
    %456 = vmatpush1.msra.mxu0 0.0
    %457 = vmatprep.subr.mxu0 0.0
    %458 = vmatpush1.msra.mxu0 0.0
    %459 = vmatprep.subr.mxu0 0.0
    %460 = vmatpush1.msra.mxu0 0.0
    %461 = vmatprep.subr.mxu0 0.0
    %462 = vmatpush1.msra.mxu0 0.0
    %463 = vmatprep.subr.mxu0 0.0
    %464 = vmatpush1.msra.mxu0 0.0
    %465 = vmatprep.subr.mxu0 0.0
    %466 = vmatpush1.msra.mxu0 0.0
    %467 = vmatprep.subr.mxu0 0.0
    %468 = vmatpush1.msra.mxu0 0.0
    %469 = vmatprep.subr.mxu0 0.0
    %470 = vmatpush1.msra.mxu0 0.0
    %471 = vmatprep.subr.mxu0 0.0
    %472 = vmatpush1.msra.mxu0 0.0
    %473 = vmatprep.subr.mxu0 0.0
    %474 = vmatpush1.msra.mxu0 0.0
    %475 = vmatprep.subr.mxu0 0.0
    %476 = vmatpush1.msra.mxu0 0.0
    %477 = vmatprep.subr.mxu0 0.0
    %478 = vmatpush1.msra.mxu0 0.0
    %479 = vmatprep.subr.mxu0 0.0
    %480 = vmatpush1.msra.mxu0 0.0
    %481 = vmatprep.subr.mxu0 0.0
    %482 = vmatpush1.msra.mxu0 0.0
    %483 = vmatprep.subr.mxu0 0.0
    %484 = vmatpush1.msra.mxu0 0.0
    %485 = vmatprep.subr.mxu0 0.0
    %486 = vmatpush1.msra.mxu0 0.0
    %487 = vmatprep.subr.mxu0 0.0
    %488 = vmatpush1.msra.mxu0 0.0
    %489 = vmatprep.mubr.f32.mxu0 0.0
    %490 = vmatmul.mubr.f32.gmra.mrb[0].mxu0 %v414
    %v491 = vpop.f32.mrb[0].mxu0
    %v492 = vadd.f32 0.0, %v491
    %v493 = vpop.f32.mrb[0].mxu0
    %494 = vmatprep.mubr.f32.mxu0 0.0
    %495 = vmatmul.mubr.f32.gmra.mrb[0].mxu0 %v417
    %v496 = vpop.f32.mrb[0].mxu0
    %v497 = vadd.f32 0.0, %v496
    %v498 = vpop.f32.mrb[0].mxu0
    %499 = vmatprep.mubr.f32.mxu0 0.0
    %500 = vmatmul.mubr.f32.gmra.mrb[0].mxu0 %v420
    %v501 = vpop.f32.mrb[0].mxu0
    %v502 = vadd.f32 0.0, %v501
    %v503 = vpop.f32.mrb[0].mxu0
    %504 = vmatprep.mubr.f32.mxu0 0.0
    %505 = vmatmul.mubr.f32.gmra.mrb[0].mxu0 %v423
    %v506 = vpop.f32.mrb[0].mxu0
    %v507 = vadd.f32 0.0, %v506
    %v508 = vpop.f32.mrb[0].mxu0
    %509 = vdwg.mxu0
    %v510 = vld [vmem:[%s4] sm:$0xff]
    %v511 = vld [vmem:[%s4 + $0x8] sm:$0xff]
    %v512 = vld [vmem:[%s4 + $0x10] sm:$0xff]
    %v513 = vld [vmem:[%s4 + $0x18] sm:$0xff]
    %s514 = scalar_lea.vmem %s4, 32
    %v515 = vld [vmem:[%s514] sm:$0xff]
    %v516 = vld [vmem:[%s514 + $0x8] sm:$0xff]
    %v517 = vld [vmem:[%s514 + $0x10] sm:$0xff]
    %v518 = vld [vmem:[%s514 + $0x18] sm:$0xff]
    %v520 = vsel %vm315, %v199, 0
    %v523 = vsel %vm315, %v204, 0
    %v526 = vsel %vm315, %v209, 0
    %v529 = vsel %vm315, %v214, 0
    %531 = vmatprep.subr.mxu0 0.0
    %532 = vmatpush1.msra.mxu0 %v515
    %533 = vmatprep.subr.mxu0 0.0
    %534 = vmatpush1.msra.mxu0 %v516
    %535 = vmatprep.subr.mxu0 0.0
    %536 = vmatpush1.msra.mxu0 %v517
    %537 = vmatprep.subr.mxu0 0.0
    %538 = vmatpush1.msra.mxu0 %v518
    %539 = vmatprep.subr.mxu0 0.0
    %540 = vmatpush1.msra.mxu0 0.0
    %541 = vmatprep.subr.mxu0 0.0
    %542 = vmatpush1.msra.mxu0 0.0
    %543 = vmatprep.subr.mxu0 0.0
    %544 = vmatpush1.msra.mxu0 0.0
    %545 = vmatprep.subr.mxu0 0.0
    %546 = vmatpush1.msra.mxu0 0.0
    %547 = vmatprep.subr.mxu0 0.0
    %548 = vmatpush1.msra.mxu0 0.0
    %549 = vmatprep.subr.mxu0 0.0
    %550 = vmatpush1.msra.mxu0 0.0
    %551 = vmatprep.subr.mxu0 0.0
    %552 = vmatpush1.msra.mxu0 0.0
    %553 = vmatprep.subr.mxu0 0.0
    %554 = vmatpush1.msra.mxu0 0.0
    %555 = vmatprep.subr.mxu0 0.0
    %556 = vmatpush1.msra.mxu0 0.0
    %557 = vmatprep.subr.mxu0 0.0
    %558 = vmatpush1.msra.mxu0 0.0
    %559 = vmatprep.subr.mxu0 0.0
    %560 = vmatpush1.msra.mxu0 0.0
    %561 = vmatprep.subr.mxu0 0.0
    %562 = vmatpush1.msra.mxu0 0.0
    %563 = vmatprep.subr.mxu0 0.0
    %564 = vmatpush1.msra.mxu0 0.0
    %565 = vmatprep.subr.mxu0 0.0
    %566 = vmatpush1.msra.mxu0 0.0
    %567 = vmatprep.subr.mxu0 0.0
    %568 = vmatpush1.msra.mxu0 0.0
    %569 = vmatprep.subr.mxu0 0.0
    %570 = vmatpush1.msra.mxu0 0.0
    %571 = vmatprep.subr.mxu0 0.0
    %572 = vmatpush1.msra.mxu0 0.0
    %573 = vmatprep.subr.mxu0 0.0
    %574 = vmatpush1.msra.mxu0 0.0
    %575 = vmatprep.subr.mxu0 0.0
    %576 = vmatpush1.msra.mxu0 0.0
    %577 = vmatprep.subr.mxu0 0.0
    %578 = vmatpush1.msra.mxu0 0.0
    %579 = vmatprep.subr.mxu0 0.0
    %580 = vmatpush1.msra.mxu0 0.0
    %581 = vmatprep.subr.mxu0 0.0
    %582 = vmatpush1.msra.mxu0 0.0
    %583 = vmatprep.subr.mxu0 0.0
    %584 = vmatpush1.msra.mxu0 0.0
    %585 = vmatprep.subr.mxu0 0.0
    %586 = vmatpush1.msra.mxu0 0.0
    %587 = vmatprep.subr.mxu0 0.0
    %588 = vmatpush1.msra.mxu0 0.0
    %589 = vmatprep.subr.mxu0 0.0
    %590 = vmatpush1.msra.mxu0 0.0
    %591 = vmatprep.subr.mxu0 0.0
    %592 = vmatpush1.msra.mxu0 0.0
    %593 = vmatprep.subr.mxu0 0.0
    %594 = vmatpush1.msra.mxu0 0.0
    %595 = vmatprep.mubr.f32.mxu0 0.0
    %596 = vmatmul.mubr.f32.gmra.mrb[0].mxu0 %v520
    %v597 = vpop.f32.mrb[0].mxu0
    %v598 = vadd.f32 0.0, %v597
    %v599 = vpop.f32.mrb[0].mxu0
    %600 = vmatprep.mubr.f32.mxu0 0.0
    %601 = vmatmul.mubr.f32.gmra.mrb[0].mxu0 %v523
    %v602 = vpop.f32.mrb[0].mxu0
    %v603 = vadd.f32 0.0, %v602
    %v604 = vpop.f32.mrb[0].mxu0
    %605 = vmatprep.mubr.f32.mxu0 0.0
    %606 = vmatmul.mubr.f32.gmra.mrb[0].mxu0 %v526
    %v607 = vpop.f32.mrb[0].mxu0
    %v608 = vadd.f32 0.0, %v607
    %v609 = vpop.f32.mrb[0].mxu0
    %610 = vmatprep.mubr.f32.mxu0 0.0
    %611 = vmatmul.mubr.f32.gmra.mrb[0].mxu0 %v529
    %v612 = vpop.f32.mrb[0].mxu0
    %v613 = vadd.f32 0.0, %v612
    %v614 = vpop.f32.mrb[0].mxu0
    %615 = vdwg.mxu0
    %v617 = vsel %vm315, %v395, 0
    %v620 = vsel %vm315, %v400, 0
    %v623 = vsel %vm315, %v405, 0
    %v626 = vsel %vm315, %v410, 0
    %628 = vmatprep.subr.mxu0 0.0
    %629 = vmatpush1.msra.mxu0 %v510
    %630 = vmatprep.subr.mxu0 0.0
    %631 = vmatpush1.msra.mxu0 %v511
    %632 = vmatprep.subr.mxu0 0.0
    %633 = vmatpush1.msra.mxu0 %v512
    %634 = vmatprep.subr.mxu0 0.0
    %635 = vmatpush1.msra.mxu0 %v513
    %636 = vmatprep.subr.mxu0 0.0
    %637 = vmatpush1.msra.mxu0 0.0
    %638 = vmatprep.subr.mxu0 0.0
    %639 = vmatpush1.msra.mxu0 0.0
    %640 = vmatprep.subr.mxu0 0.0
    %641 = vmatpush1.msra.mxu0 0.0
    %642 = vmatprep.subr.mxu0 0.0
    %643 = vmatpush1.msra.mxu0 0.0
    %644 = vmatprep.subr.mxu0 0.0
    %645 = vmatpush1.msra.mxu0 0.0
    %646 = vmatprep.subr.mxu0 0.0
    %647 = vmatpush1.msra.mxu0 0.0
    %648 = vmatprep.subr.mxu0 0.0
    %649 = vmatpush1.msra.mxu0 0.0
    %650 = vmatprep.subr.mxu0 0.0
    %651 = vmatpush1.msra.mxu0 0.0
    %652 = vmatprep.subr.mxu0 0.0
    %653 = vmatpush1.msra.mxu0 0.0
    %654 = vmatprep.subr.mxu0 0.0
    %655 = vmatpush1.msra.mxu0 0.0
    %656 = vmatprep.subr.mxu0 0.0
    %657 = vmatpush1.msra.mxu0 0.0
    %658 = vmatprep.subr.mxu0 0.0
    %659 = vmatpush1.msra.mxu0 0.0
    %660 = vmatprep.subr.mxu0 0.0
    %661 = vmatpush1.msra.mxu0 0.0
    %662 = vmatprep.subr.mxu0 0.0
    %663 = vmatpush1.msra.mxu0 0.0
    %664 = vmatprep.subr.mxu0 0.0
    %665 = vmatpush1.msra.mxu0 0.0
    %666 = vmatprep.subr.mxu0 0.0
    %667 = vmatpush1.msra.mxu0 0.0
    %668 = vmatprep.subr.mxu0 0.0
    %669 = vmatpush1.msra.mxu0 0.0
    %670 = vmatprep.subr.mxu0 0.0
    %671 = vmatpush1.msra.mxu0 0.0
    %672 = vmatprep.subr.mxu0 0.0
    %673 = vmatpush1.msra.mxu0 0.0
    %674 = vmatprep.subr.mxu0 0.0
    %675 = vmatpush1.msra.mxu0 0.0
    %676 = vmatprep.subr.mxu0 0.0
    %677 = vmatpush1.msra.mxu0 0.0
    %678 = vmatprep.subr.mxu0 0.0
    %679 = vmatpush1.msra.mxu0 0.0
    %680 = vmatprep.subr.mxu0 0.0
    %681 = vmatpush1.msra.mxu0 0.0
    %682 = vmatprep.subr.mxu0 0.0
    %683 = vmatpush1.msra.mxu0 0.0
    %684 = vmatprep.subr.mxu0 0.0
    %685 = vmatpush1.msra.mxu0 0.0
    %686 = vmatprep.subr.mxu0 0.0
    %687 = vmatpush1.msra.mxu0 0.0
    %688 = vmatprep.subr.mxu0 0.0
    %689 = vmatpush1.msra.mxu0 0.0
    %690 = vmatprep.subr.mxu0 0.0
    %691 = vmatpush1.msra.mxu0 0.0
    %692 = vmatprep.mubr.f32.mxu0 0.0
    %693 = vmatmul.mubr.f32.gmra.mrb[0].mxu0 %v617
    %v694 = vpop.f32.mrb[0].mxu0
    %v695 = vadd.f32 %v598, %v694
    %v696 = vpop.f32.mrb[0].mxu0
    %697 = vmatprep.mubr.f32.mxu0 0.0
    %698 = vmatmul.mubr.f32.gmra.mrb[0].mxu0 %v620
    %v699 = vpop.f32.mrb[0].mxu0
    %v700 = vadd.f32 %v603, %v699
    %v701 = vpop.f32.mrb[0].mxu0
    %702 = vmatprep.mubr.f32.mxu0 0.0
    %703 = vmatmul.mubr.f32.gmra.mrb[0].mxu0 %v623
    %v704 = vpop.f32.mrb[0].mxu0
    %v705 = vadd.f32 %v608, %v704
    %v706 = vpop.f32.mrb[0].mxu0
    %707 = vmatprep.mubr.f32.mxu0 0.0
    %708 = vmatmul.mubr.f32.gmra.mrb[0].mxu0 %v626
    %v709 = vpop.f32.mrb[0].mxu0
    %v710 = vadd.f32 %v613, %v709
    %v711 = vpop.f32.mrb[0].mxu0
    %712 = vdwg.mxu0
    %s713 = scalar_lea.vmem %s4, 64
    %v714 = vld [vmem:[%s713] sm:$0xff]
    %v715 = vld [vmem:[%s713 + $0x8] sm:$0xff]
    %v716 = vld [vmem:[%s713 + $0x10] sm:$0xff]
    %v717 = vld [vmem:[%s713 + $0x18] sm:$0xff]
    %v719 = vsel %vm315, %v492, 0
    %v722 = vsel %vm315, %v497, 0
    %v725 = vsel %vm315, %v502, 0
    %v728 = vsel %vm315, %v507, 0
    %730 = vmatprep.subr.mxu0 0.0
    %731 = vmatpush1.msra.mxu0 %v714
    %732 = vmatprep.subr.mxu0 0.0
    %733 = vmatpush1.msra.mxu0 %v715
    %734 = vmatprep.subr.mxu0 0.0
    %735 = vmatpush1.msra.mxu0 %v716
    %736 = vmatprep.subr.mxu0 0.0
    %737 = vmatpush1.msra.mxu0 %v717
    %738 = vmatprep.subr.mxu0 0.0
    %739 = vmatpush1.msra.mxu0 0.0
    %740 = vmatprep.subr.mxu0 0.0
    %741 = vmatpush1.msra.mxu0 0.0
    %742 = vmatprep.subr.mxu0 0.0
    %743 = vmatpush1.msra.mxu0 0.0
    %744 = vmatprep.subr.mxu0 0.0
    %745 = vmatpush1.msra.mxu0 0.0
    %746 = vmatprep.subr.mxu0 0.0
    %747 = vmatpush1.msra.mxu0 0.0
    %748 = vmatprep.subr.mxu0 0.0
    %749 = vmatpush1.msra.mxu0 0.0
    %750 = vmatprep.subr.mxu0 0.0
    %751 = vmatpush1.msra.mxu0 0.0
    %752 = vmatprep.subr.mxu0 0.0
    %753 = vmatpush1.msra.mxu0 0.0
    %754 = vmatprep.subr.mxu0 0.0
    %755 = vmatpush1.msra.mxu0 0.0
    %756 = vmatprep.subr.mxu0 0.0
    %757 = vmatpush1.msra.mxu0 0.0
    %758 = vmatprep.subr.mxu0 0.0
    %759 = vmatpush1.msra.mxu0 0.0
    %760 = vmatprep.subr.mxu0 0.0
    %761 = vmatpush1.msra.mxu0 0.0
    %762 = vmatprep.subr.mxu0 0.0
    %763 = vmatpush1.msra.mxu0 0.0
    %764 = vmatprep.subr.mxu0 0.0
    %765 = vmatpush1.msra.mxu0 0.0
    %766 = vmatprep.subr.mxu0 0.0
    %767 = vmatpush1.msra.mxu0 0.0
    %768 = vmatprep.subr.mxu0 0.0
    %769 = vmatpush1.msra.mxu0 0.0
    %770 = vmatprep.subr.mxu0 0.0
    %771 = vmatpush1.msra.mxu0 0.0
    %772 = vmatprep.subr.mxu0 0.0
    %773 = vmatpush1.msra.mxu0 0.0
    %774 = vmatprep.subr.mxu0 0.0
    %775 = vmatpush1.msra.mxu0 0.0
    %776 = vmatprep.subr.mxu0 0.0
    %777 = vmatpush1.msra.mxu0 0.0
    %778 = vmatprep.subr.mxu0 0.0
    %779 = vmatpush1.msra.mxu0 0.0
    %780 = vmatprep.subr.mxu0 0.0
    %781 = vmatpush1.msra.mxu0 0.0
    %782 = vmatprep.subr.mxu0 0.0
    %783 = vmatpush1.msra.mxu0 0.0
    %784 = vmatprep.subr.mxu0 0.0
    %785 = vmatpush1.msra.mxu0 0.0
    %786 = vmatprep.subr.mxu0 0.0
    %787 = vmatpush1.msra.mxu0 0.0
    %788 = vmatprep.subr.mxu0 0.0
    %789 = vmatpush1.msra.mxu0 0.0
    %790 = vmatprep.subr.mxu0 0.0
    %791 = vmatpush1.msra.mxu0 0.0
    %792 = vmatprep.subr.mxu0 0.0
    %793 = vmatpush1.msra.mxu0 0.0
    %794 = vmatprep.mubr.f32.mxu0 0.0
    %795 = vmatmul.mubr.f32.gmra.mrb[0].mxu0 %v719
    %v796 = vpop.f32.mrb[0].mxu0
    %v797 = vadd.f32 0.0, %v796
    %v798 = vpop.f32.mrb[0].mxu0
    %799 = vmatprep.mubr.f32.mxu0 0.0
    %800 = vmatmul.mubr.f32.gmra.mrb[0].mxu0 %v722
    %v801 = vpop.f32.mrb[0].mxu0
    %v802 = vadd.f32 0.0, %v801
    %v803 = vpop.f32.mrb[0].mxu0
    %804 = vmatprep.mubr.f32.mxu0 0.0
    %805 = vmatmul.mubr.f32.gmra.mrb[0].mxu0 %v725
    %v806 = vpop.f32.mrb[0].mxu0
    %v807 = vadd.f32 0.0, %v806
    %v808 = vpop.f32.mrb[0].mxu0
    %809 = vmatprep.mubr.f32.mxu0 0.0
    %810 = vmatmul.mubr.f32.gmra.mrb[0].mxu0 %v728
    %v811 = vpop.f32.mrb[0].mxu0
    %v812 = vadd.f32 0.0, %v811
    %v813 = vpop.f32.mrb[0].mxu0
    %814 = vdwg.mxu0
    %v815 = vadd.f32 %v695, %v797
    %v816 = vadd.f32 %v700, %v802
    %v817 = vadd.f32 %v705, %v807
    %v818 = vadd.f32 %v710, %v812
    %v819 = vsel %vm315, %v815, -inf
    %v820 = vsel %vm315, %v816, -inf
    %v821 = vmax.f32 %v819, %v820
    %v822 = vrot.slane %v821, 4
    %v823 = vmax.f32 %v821, %v822
    %v824 = vrot.slane %v823, 2
    %v825 = vmax.f32 %v823, %v824
    %v826 = vrot.slane %v825, 1
    %v827 = vmax.f32 %v825, %v826
    %v828 = vsel %vm315, %v817, -inf
    %v829 = vsel %vm315, %v818, -inf
    %v830 = vmax.f32 %v828, %v829
    %v831 = vrot.slane %v830, 4
    %v832 = vmax.f32 %v830, %v831
    %v833 = vrot.slane %v832, 2
    %v834 = vmax.f32 %v832, %v833
    %v835 = vrot.slane %v834, 1
    %v836 = vmax.f32 %v834, %v835
    %v837 = vld [vmem:[%s5] sm:$0x1]
    %v839 = vlaneseq
    %v840 = vshrl.u32 %v839, 7
    %v841 = vsub.s32 0, %v840
    %v842 = vrot.slane %v837, %v841
    %v844 = vadd.f32 %v827, %v842
    %v845 = vadd.f32 %v836, %v842
    %v846 = vmax.f32 %v844, 0.0
    %v847 = vmax.f32 %v845, 0.0
    %v848 = vld [vmem:[%s6] sm:$0xff]
    %v849 = vld [vmem:[%s6 + $0x8] sm:$0xff]
    %v850 = vld [vmem:[%s6 + $0x10] sm:$0xff]
    %v851 = vld [vmem:[%s6 + $0x18] sm:$0xff]
    %v852 = vld [vmem:[%s7] sm:$0x1]
    %v854 = vlaneseq
    %v855 = vshrl.u32 %v854, 7
    %v856 = vsub.s32 0, %v855
    %v857 = vrot.slane %v852, %v856
    %v861 = vrot.slane %v847, 7
    %vm862 = vcmask 1041409
    %v863 = vsel %vm862, %v861, %v846
    %v864 = vsel %vm315, %v863, 0
    %866 = vmatprep.subr.mxu0 0.0
    %867 = vmatpush1.msra.mxu0 %v848
    %868 = vmatprep.subr.mxu0 0.0
    %869 = vmatpush1.msra.mxu0 %v849
    %870 = vmatprep.subr.mxu0 0.0
    %871 = vmatpush1.msra.mxu0 %v850
    %872 = vmatprep.subr.mxu0 0.0
    %873 = vmatpush1.msra.mxu0 %v851
    %874 = vmatprep.subr.mxu0 0.0
    %875 = vmatpush1.msra.mxu0 0.0
    %876 = vmatprep.subr.mxu0 0.0
    %877 = vmatpush1.msra.mxu0 0.0
    %878 = vmatprep.subr.mxu0 0.0
    %879 = vmatpush1.msra.mxu0 0.0
    %880 = vmatprep.subr.mxu0 0.0
    %881 = vmatpush1.msra.mxu0 0.0
    %882 = vmatprep.subr.mxu0 0.0
    %883 = vmatpush1.msra.mxu0 0.0
    %884 = vmatprep.subr.mxu0 0.0
    %885 = vmatpush1.msra.mxu0 0.0
    %886 = vmatprep.subr.mxu0 0.0
    %887 = vmatpush1.msra.mxu0 0.0
    %888 = vmatprep.subr.mxu0 0.0
    %889 = vmatpush1.msra.mxu0 0.0
    %890 = vmatprep.subr.mxu0 0.0
    %891 = vmatpush1.msra.mxu0 0.0
    %892 = vmatprep.subr.mxu0 0.0
    %893 = vmatpush1.msra.mxu0 0.0
    %894 = vmatprep.subr.mxu0 0.0
    %895 = vmatpush1.msra.mxu0 0.0
    %896 = vmatprep.subr.mxu0 0.0
    %897 = vmatpush1.msra.mxu0 0.0
    %898 = vmatprep.subr.mxu0 0.0
    %899 = vmatpush1.msra.mxu0 0.0
    %900 = vmatprep.subr.mxu0 0.0
    %901 = vmatpush1.msra.mxu0 0.0
    %902 = vmatprep.subr.mxu0 0.0
    %903 = vmatpush1.msra.mxu0 0.0
    %904 = vmatprep.subr.mxu0 0.0
    %905 = vmatpush1.msra.mxu0 0.0
    %906 = vmatprep.subr.mxu0 0.0
    %907 = vmatpush1.msra.mxu0 0.0
    %908 = vmatprep.subr.mxu0 0.0
    %909 = vmatpush1.msra.mxu0 0.0
    %910 = vmatprep.subr.mxu0 0.0
    %911 = vmatpush1.msra.mxu0 0.0
    %912 = vmatprep.subr.mxu0 0.0
    %913 = vmatpush1.msra.mxu0 0.0
    %914 = vmatprep.subr.mxu0 0.0
    %915 = vmatpush1.msra.mxu0 0.0
    %916 = vmatprep.subr.mxu0 0.0
    %917 = vmatpush1.msra.mxu0 0.0
    %918 = vmatprep.subr.mxu0 0.0
    %919 = vmatpush1.msra.mxu0 0.0
    %920 = vmatprep.subr.mxu0 0.0
    %921 = vmatpush1.msra.mxu0 0.0
    %922 = vmatprep.subr.mxu0 0.0
    %923 = vmatpush1.msra.mxu0 0.0
    %924 = vmatprep.subr.mxu0 0.0
    %925 = vmatpush1.msra.mxu0 0.0
    %926 = vmatprep.subr.mxu0 0.0
    %927 = vmatpush1.msra.mxu0 0.0
    %928 = vmatprep.subr.mxu0 0.0
    %929 = vmatpush1.msra.mxu0 0.0
    %930 = vmatprep.mubr.f32.mxu0 0.0
    %931 = vmatmul.mubr.f32.gmra.mrb[0].mxu0 %v864
    %v932 = vpop.f32.mrb[0].mxu0
    %v933 = vadd.f32 %v857, %v932
    %v934 = vpop.f32.mrb[0].mxu0
    %935 = vdwg.mxu0
    %936 = vst [vmem:[#allocation2] sm:$0x3] %v933
    // Predicated region
    $region34: #{model_forward.1} parent=1 // pred_check
      _
    $region35: #{model_forward.1} parent=1 // pred_check_branch
      %938 = sbr.rel (0) target = $region37
    $region36: #{model_forward.1} parent=1 // pred_region
      %s940 = ssub.s32 32, 32
      %941 = vsyncadd [#allocation3], %s940
      %s943 = sshll.u32 [#allocation2], 4
      %s944 = int_to_ptr.vmem [resolvable:$true] %s943
      %946 = dma.vmem_to_hbm [thread:$0]  %s944, 32, %s8, [#allocation3]
    $region37: #{model_forward.1} parent=1 // pred_fallthru
      _
    // Predicated region
    $region38: #{model_forward.1} parent=1 // pred_check
      _
    $region39: #{model_forward.1} parent=1 // pred_check_branch
      %948 = sbr.rel (0) target = $region41
    $region40: #{model_forward.1} parent=1 // pred_region
      %949 = dma.done [#allocation3], 32
    $region41: #{model_forward.1} parent=1 // pred_fallthru
      _
    %950 = vsyncpa [#allocation3], 1

</llo_original>
